<compile_context>
chip_gen: v5e
topology: v5e:2x2
jax: 0.10.0
libtpu: 0.0.40
codegen_flags: <defaults>
</compile_context>

<pallas_src>
import jax
import jax.numpy as jnp
from jax.experimental import pallas as pl
from jax.experimental.pallas import tpu as pltpu

# Split the HBM->HBM copy across a 2-wide parallel grid (v7x: 2 TensorCores)
# only when the array is large enough for the split to matter and the leading
# axis divides evenly (so every chunk has a static size).
_CHUNK_SPLIT_MIN_BYTES = 8 * 1024 * 1024


def _identity_copy_pallas(x: jax.Array) -> jax.Array:
    """Copy `x` into a fresh buffer via a direct HBM->HBM async DMA."""
    orig_shape = x.shape
    if x.ndim == 0:
        # Give the DMA a 1-D ref to work with; reshape of a scalar is free.
        x = x.reshape(1)

    leading = x.shape[0]
    nbytes = x.size * jnp.dtype(x.dtype).itemsize
    n_chunks = 2 if (leading % 2 == 0 and nbytes >= _CHUNK_SPLIT_MIN_BYTES) else 1
    chunk = leading // n_chunks  # static chunk size along the leading axis

    def kernel(x_hbm, o_hbm, sem):
        if n_chunks == 1:
            # Single descriptor: whole-array HBM->HBM copy. Source and
            # destination have identical shape/dtype/layout, so this is a
            # straight memcpy at HBM bandwidth — no VMEM staging at all.
            cp = pltpu.make_async_copy(x_hbm, o_hbm, sem)
        else:
            # One half-slab per grid step; "parallel" lets v7x shard the two
            # slabs across its two TensorCores.
            start = pl.multiple_of(pl.program_id(0) * chunk, chunk)
            cp = pltpu.make_async_copy(
                x_hbm.at[pl.ds(start, chunk)],
                o_hbm.at[pl.ds(start, chunk)],
                sem,
            )
        cp.start()
        cp.wait()

    out = pl.pallas_call(
        kernel,
        out_shape=jax.ShapeDtypeStruct(x.shape, x.dtype),
        grid=(n_chunks,),
        in_specs=[pl.BlockSpec(memory_space=pl.ANY)],
        out_specs=pl.BlockSpec(memory_space=pl.ANY),
        scratch_shapes=[pltpu.SemaphoreType.DMA(())],
        compiler_params=pltpu.CompilerParams(
            dimension_semantics=("parallel",),
            has_side_effects=True,
        ),
    )(x)
    return out.reshape(orig_shape)


def identity_pallas(x: jax.Array, *, force_copy: bool = False) -> jax.Array:
    """Identity forward pass (matches PyTorch `return x`).

    Default: return the input as-is — Identity is pure data movement, so
    eliminating the HBM read+write entirely is the only real optimization.
    force_copy=True performs a direct HBM->HBM DMA copy inside a Pallas
    kernel (for when a distinct output buffer is explicitly required).
    Note: the default path aliases the input; callers relying on a distinct
    buffer (e.g. with donated/reused inputs) must pass force_copy=True.
    """
    if not force_copy or x.size == 0:
        return x
    return _identity_copy_pallas(x)


if __name__ == "__main__":
    key = jax.random.PRNGKey(0)
    k0, k1, k2 = jax.random.split(key, 3)

    # Small NCHW input consistent with the module's typical usage.
    x = jax.random.normal(k0, (2, 4, 16, 16), dtype=jnp.float32)

    # 1) Default Identity forward: zero-copy, returns x.
    y = identity_pallas(x)
    jax.block_until_ready(y)
    assert y.shape == x.shape and y.dtype == x.dtype
    assert bool(jnp.all(y == x)), "Identity (zero-copy) mismatch"

    # 2) Single HBM->HBM DMA copy kernel on the small NCHW input.
    y_copy = identity_pallas(x, force_copy=True)
    jax.block_until_ready(y_copy)
    assert y_copy.shape == x.shape and y_copy.dtype == x.dtype
    assert bool(jnp.all(y_copy == x)), "Identity (Pallas DMA copy) mismatch"

    # 3) Odd-sized, non-lane-aligned bf16 input: whole-ref DMA handles ragged
    #    shapes directly — no wrapper-side pad / slice passes.
    x2 = jax.random.normal(k1, (3, 5, 17, 13), dtype=jnp.bfloat16)
    y2 = identity_pallas(x2, force_copy=True)
    jax.block_until_ready(y2)
    assert y2.shape == x2.shape and y2.dtype == x2.dtype
    assert bool(jnp.all(y2 == x2)), "Identity (Pallas DMA copy, bf16) mismatch"

    # 4) 8 MiB f32 input with an even leading axis exercises the 2-chunk
    #    "parallel" grid variant (drives both TensorCores' DMA paths on v7x).
    x3 = jax.random.normal(k2, (2, 1024, 1024), dtype=jnp.float32)
    y3 = identity_pallas(x3, force_copy=True)
    jax.block_until_ready(y3)
    assert y3.shape == x3.shape and y3.dtype == x3.dtype
    assert bool(jnp.all(y3 == x3)), "Identity (Pallas DMA copy, chunked) mismatch"

    print("KERNEL_OK")
</pallas_src>

<mosaic_0001>
module attributes {stable_mosaic.version = 11 : i64} {
  func.func @kernel(%arg0: i32, %arg1: memref<2x4x16x16xf32, #tpu.memory_space<any>>, %arg2: memref<2x4x16x16xf32, #tpu.memory_space<any>>, %arg3: memref<!tpu.dma_semaphore, #tpu.memory_space<semaphore_mem>>) attributes {dimension_semantics = [#tpu.dimension_semantics<parallel>], iteration_bounds = array<i64: 1>, scalar_prefetch = 0 : i64, scratch_operands = 1 : i64, tpu.core_type = #tpu.core_type<tc>, window_params = [{}, {}]} {
    tpu.enqueue_dma source(%arg1 : memref<2x4x16x16xf32, #tpu.memory_space<any>>) target(%arg2 : memref<2x4x16x16xf32, #tpu.memory_space<any>>) target_semaphore(%arg3 : memref<!tpu.dma_semaphore, #tpu.memory_space<semaphore_mem>>)
    tpu.wait_dma2 semaphore(%arg3 : memref<!tpu.dma_semaphore, #tpu.memory_space<semaphore_mem>>) src(%arg1 : memref<2x4x16x16xf32, #tpu.memory_space<any>>) dst(%arg2 : memref<2x4x16x16xf32, #tpu.memory_space<any>>)
    return
  }
}

</mosaic_0001>

<llo_original>
// kernel: tpu_custom_call.1
$region0: #{tpu_custom_call.1}
  #allocation0 [shape = 'u32[]', space=smem, size = 0x4, offset = 0x4, fixed_abs, tag = 'smem constant byte address 0x4 - core index']
  #allocation1 [shape = 'u32[72,128]{1,0:T(1,128)}', space=vmem, size = 0x9000, scoped, tag = 'internal scratch']
  #allocation2 [shape = 's32[1]{0}', space=sflag, size = 0x4, scoped, tag = 'scratch operand']
  #allocation3 [shape = 's32[]', space=sflag, size = 0x4, offset = 0, fixed_abs, tag = 'sflag constant byte address 0x0 - dummy sync flag']
  #allocation4 [shape = 'u32[0]{0}', space=smem, size = 0, offset = 0, fixed_abs, tag = 'smem constant byte address 0x0 - null']
  %s0 = inlined_call_operand.hbm [shape: f32[2,4,16,16], index: 0, kind: input, shape index: {}]
  %s1 = inlined_call_operand.hbm [shape: f32[2,4,16,16], index: 1, kind: output, shape index: {}]
  %s2 = sld [smem:[#allocation0]]
  $region2: #{tpu_custom_call.1} parent=0
    _
  %s4 = ssub.s32 1, %s2
  %s5 = scalar_select 0, %s4, %s2
  %s7 = sshll.u32 1, 14
  %s8 = sxor.u32 4294967295, %s7
  %s10 = sshll.u32 %s0, 4
  %s11 = int_to_ptr.hbm [resolvable:$true] %s10
  %s12 = sshll.u32 %s1, 4
  %s13 = int_to_ptr.hbm [resolvable:$true] %s12
  %16 = dma.general %s11, 2048, %s13, [#allocation2], [#allocation3], [#allocation4], 0, 0
  %s17 = smul.u32 2, 4
  %s18 = smul.u32 %s17, 16
  %s19 = smul.u32 %s18, 1
  %s20 = sshll.u32 %s19, 4
  %21 = dma.done [#allocation2], %s20
  %22 = vsyncmov [#allocation2]
  %s23 = vpop.sfrf %22
  %p24 = scmp.eq.s32.totalorder %s23, 0
  %p25 = pneg %p24
  %27 = shalt.err (%p25)

</llo_original>
